<compile_context>
chip_gen: v7x
topology: tpu7x:2x2x1
jax: 0.10.0
libtpu: 0.0.40
codegen_flags: <defaults>
</compile_context>

<pallas_src>
import functools

import jax
import jax.numpy as jnp
from jax import lax
from jax.experimental import pallas as pl
from jax.experimental.pallas import tpu as pltpu


def _fec_kernel(p_ref, w1_ref, s1_ref, t1_ref, w2_ref, s2_ref, t2_ref, out_ref):
    """One batch element per grid step, channel-major.

    p_ref  : (9*Cin, H*W)   im2col patches (lane axis = H*W)
    w1_ref : (Cmid, 9*Cin)  3x3 conv weights, flattened [dy, dx, cin]
    s1/t1  : (Cmid, 1)      folded BN1 scale / shift (conv1 bias folded in)
    w2_ref : (Cout, Cmid)   1x1 conv weights (transposed)
    s2/t2  : (Cout, 1)      folded BN2 scale / shift (+ conv1 bias for residual)
    out_ref: (Cout, H*W)
    """
    patches = p_ref[...]

    # 3x3 conv (no bias) as a single K = 9*Cin matmul on the MXU.
    acc = jnp.dot(w1_ref[...], patches, preferred_element_type=jnp.float32)

    # bn1(conv1 + b1) + ReLU   (b1 folded into t1')
    h = jnp.maximum(acc * s1_ref[...] + t1_ref[...], 0.0)

    # 1x1 conv == channel matmul.
    z = jnp.dot(w2_ref[...], h.astype(w2_ref.dtype),
                preferred_element_type=jnp.float32)

    # bn2 + residual (identity = conv1 + b1 = acc + b1; b1 folded into t2') + ReLU
    out_ref[...] = jnp.maximum(z * s2_ref[...] + t2_ref[...] + acc, 0.0)


def fec_pallas(x_nchw, params, *, eps=1e-5, matmul_dtype=jnp.float32):
    """x_nchw: (N, Cin, H, W) float32. Returns (N, Cout, H, W).

    matmul_dtype=jnp.bfloat16 halves HBM/VMEM traffic and roughly doubles MXU
    throughput on v5e/v6e/v7x (accumulation stays f32); loosen the verification
    tolerance if you use it.
    """
    (w1, b1, g1, be1, m1, v1, w2, g2, be2, m2, v2) = params
    N, Cin, H, W = x_nchw.shape
    Cmid = w1.shape[-1]
    Cout = w2.shape[-1]
    assert Cmid == Cout, "FEC residual add requires mid_ch == out_ch"
    HW = H * W

    # ---- Fold BatchNorm (eval mode) + conv1 bias into per-channel affines. ----
    s1 = g1 / jnp.sqrt(v1 + eps)
    t1 = be1 - m1 * s1
    s2 = g2 / jnp.sqrt(v2 + eps)
    t2 = be2 - m2 * s2
    t1p = (s1 * b1 + t1).reshape(Cmid, 1)   # bn1 applied to (conv + b1)
    t2p = (t2 + b1).reshape(Cout, 1)        # residual re-adds b1 (identity = conv + b1)
    s1 = s1.reshape(Cmid, 1)
    s2 = s2.reshape(Cout, 1)

    # ---- im2col in the wrapper: (N, 9*Cin, H*W), channel-major. ----
    # TODO(synk): for production-sized images, tile H with a 1-row halo inside the
    # kernel instead of materializing padded im2col patches in HBM.
    x = x_nchw.astype(jnp.float32)
    xp = jnp.pad(x, ((0, 0), (0, 0), (1, 1), (1, 1)))
    taps = [xp[:, :, dy:dy + H, dx:dx + W].reshape(N, Cin, HW)
            for dy in range(3) for dx in range(3)]
    patches = jnp.concatenate(taps, axis=1)                     # (N, 9*Cin, HW), [dy,dx,cin]
    w1_r = jnp.transpose(w1, (3, 0, 1, 2)).reshape(Cmid, 9 * Cin)  # matching [dy,dx,cin]
    w2_t = jnp.transpose(w2, (1, 0))                            # (Cout, Cmid)

    patches = patches.astype(matmul_dtype)
    w1_r = w1_r.astype(matmul_dtype)
    w2_t = w2_t.astype(matmul_dtype)

    const2d = lambda shape: pl.BlockSpec(shape, lambda n: (0, 0))

    out = pl.pallas_call(
        _fec_kernel,
        out_shape=jax.ShapeDtypeStruct((N, Cout, HW), jnp.float32),
        grid_spec=pltpu.PrefetchScalarGridSpec(
            num_scalar_prefetch=0,
            grid=(N,),
            in_specs=[
                pl.BlockSpec((pl.Squeezed(), 9 * Cin, HW), lambda n: (n, 0, 0)),
                const2d((Cmid, 9 * Cin)),
                const2d((Cmid, 1)),
                const2d((Cmid, 1)),
                const2d((Cout, Cmid)),
                const2d((Cout, 1)),
                const2d((Cout, 1)),
            ],
            out_specs=pl.BlockSpec((pl.Squeezed(), Cout, HW),
                                   lambda n: (n, 0, 0)),
        ),
        compiler_params=pltpu.CompilerParams(
            dimension_semantics=("parallel",)),
    )(patches, w1_r, s1, t1p, w2_t, s2, t2p)

    # Lane-dense output is already channel-major: a free reshape gives NCHW.
    return out.reshape(N, Cout, H, W)


def fec_reference(x_nchw, params, *, eps=1e-5):
    """Pure-JAX reference matching the PyTorch module (eval mode)."""
    (w1, b1, g1, be1, m1, v1, w2, g2, be2, m2, v2) = params
    x = jnp.transpose(x_nchw, (0, 2, 3, 1))
    y = lax.conv_general_dilated(
        x, w1, window_strides=(1, 1), padding="SAME",
        dimension_numbers=("NHWC", "HWIO", "NHWC")) + b1
    identity = y
    h = (y - m1) / jnp.sqrt(v1 + eps) * g1 + be1
    h = jnp.maximum(h, 0.0)
    z = jnp.einsum("nhwc,co->nhwo", h, w2)
    z = (z - m2) / jnp.sqrt(v2 + eps) * g2 + be2
    out = jnp.maximum(z + identity, 0.0)
    return jnp.transpose(out, (0, 3, 1, 2))


def make_params(key, in_ch, mid_ch, out_ch):
    ks = jax.random.split(key, 8)
    w1 = jax.random.normal(ks[0], (3, 3, in_ch, mid_ch), jnp.float32) * 0.1  # HWIO
    b1 = jax.random.normal(ks[1], (mid_ch,), jnp.float32) * 0.1
    g1 = 1.0 + 0.1 * jax.random.normal(ks[2], (mid_ch,), jnp.float32)
    be1 = 0.1 * jax.random.normal(ks[3], (mid_ch,), jnp.float32)
    m1 = 0.05 * jax.random.normal(ks[4], (mid_ch,), jnp.float32)
    v1 = jax.random.uniform(ks[5], (mid_ch,), jnp.float32, 0.5, 1.5)
    w2 = jax.random.normal(ks[6], (mid_ch, out_ch), jnp.float32) * 0.1       # (Cin, Cout)
    g2 = 1.0 + 0.1 * jax.random.normal(ks[7], (out_ch,), jnp.float32)
    be2 = jnp.zeros((out_ch,), jnp.float32)
    m2 = jnp.zeros((out_ch,), jnp.float32)
    v2 = jnp.ones((out_ch,), jnp.float32)
    return (w1, b1, g1, be1, m1, v1, w2, g2, be2, m2, v2)


if __name__ == "__main__":
    key = jax.random.PRNGKey(0)
    k_x, k_p = jax.random.split(key)

    N, IN_CH, MID_CH, OUT_CH, H, W = 2, 4, 8, 8, 16, 16  # residual needs MID_CH == OUT_CH
    x = jax.random.normal(k_x, (N, IN_CH, H, W), jnp.float32)
    params = make_params(k_p, IN_CH, MID_CH, OUT_CH)

    out = fec_pallas(x, params)
    out = jax.block_until_ready(out)

    ref = fec_reference(x, params)
    assert out.shape == (N, OUT_CH, H, W)
    assert jnp.allclose(out, ref, atol=1e-3, rtol=1e-3), "mismatch vs reference"

    print("KERNEL_OK")
</pallas_src>

<mosaic_0001>
module attributes {stable_mosaic.version = 11 : i64} {
  func.func @_fec_kernel(%arg0: i32, %arg1: memref<1x36x256xf32, #tpu.memory_space<vmem>>, %arg2: memref<8x36xf32, #tpu.memory_space<vmem>>, %arg3: memref<8x1xf32, #tpu.memory_space<vmem>>, %arg4: memref<8x1xf32, #tpu.memory_space<vmem>>, %arg5: memref<8x8xf32, #tpu.memory_space<vmem>>, %arg6: memref<8x1xf32, #tpu.memory_space<vmem>>, %arg7: memref<8x1xf32, #tpu.memory_space<vmem>>, %arg8: memref<1x8x256xf32, #tpu.memory_space<vmem>>) attributes {dimension_semantics = [#tpu.dimension_semantics<parallel>], iteration_bounds = array<i64: 2>, scalar_prefetch = 0 : i64, scratch_operands = 0 : i64, tpu.core_type = #tpu.core_type<tc>, window_params = [{transform_indices = @transform_0, window_bounds = array<i64: 1, 36, 256>}, {pipeline_mode = #tpu.pipeline_mode<synchronous>, transform_indices = @transform_1, window_bounds = array<i64: 8, 36>}, {pipeline_mode = #tpu.pipeline_mode<synchronous>, transform_indices = @transform_2, window_bounds = array<i64: 8, 1>}, {pipeline_mode = #tpu.pipeline_mode<synchronous>, transform_indices = @transform_3, window_bounds = array<i64: 8, 1>}, {pipeline_mode = #tpu.pipeline_mode<synchronous>, transform_indices = @transform_4, window_bounds = array<i64: 8, 8>}, {pipeline_mode = #tpu.pipeline_mode<synchronous>, transform_indices = @transform_5, window_bounds = array<i64: 8, 1>}, {pipeline_mode = #tpu.pipeline_mode<synchronous>, transform_indices = @transform_6, window_bounds = array<i64: 8, 1>}, {transform_indices = @transform_7, window_bounds = array<i64: 1, 8, 256>}]} {
    %c0 = arith.constant 0 : index
    %c0_0 = arith.constant 0 : index
    %c0_1 = arith.constant 0 : index
    %0 = vector.load %arg1[%c0, %c0_0, %c0_1] : memref<1x36x256xf32, #tpu.memory_space<vmem>>, vector<1x36x256xf32>
    %1 = vector.shape_cast %0 : vector<1x36x256xf32> to vector<36x256xf32>
    %c0_2 = arith.constant 0 : index
    %c0_3 = arith.constant 0 : index
    %2 = vector.load %arg2[%c0_2, %c0_3] : memref<8x36xf32, #tpu.memory_space<vmem>>, vector<8x36xf32>
    %cst = arith.constant dense<0.000000e+00> : vector<8x256xf32>
    %3 = tpu.matmul %2, %1, %cst {dimension_numbers = #tpu.dot_dimension_numbers<[1], [0], [0], [1], [0, 0, 1, 1], [], []>} : vector<8x36xf32>, vector<36x256xf32>, vector<8x256xf32> -> vector<8x256xf32>
    %c0_4 = arith.constant 0 : index
    %c0_5 = arith.constant 0 : index
    %4 = vector.load %arg3[%c0_4, %c0_5] : memref<8x1xf32, #tpu.memory_space<vmem>>, vector<8x1xf32>
    %5 = vector.broadcast %4 : vector<8x1xf32> to vector<8x256xf32>
    %6 = arith.mulf %3, %5 : vector<8x256xf32>
    %c0_6 = arith.constant 0 : index
    %c0_7 = arith.constant 0 : index
    %7 = vector.load %arg4[%c0_6, %c0_7] : memref<8x1xf32, #tpu.memory_space<vmem>>, vector<8x1xf32>
    %8 = vector.broadcast %7 : vector<8x1xf32> to vector<8x256xf32>
    %9 = arith.addf %6, %8 : vector<8x256xf32>
    %cst_8 = arith.constant 0.000000e+00 : f32
    %10 = vector.broadcast %cst_8 : f32 to vector<8x256xf32>
    %11 = arith.maximumf %9, %10 : vector<8x256xf32>
    %c0_9 = arith.constant 0 : index
    %c0_10 = arith.constant 0 : index
    %12 = vector.load %arg5[%c0_9, %c0_10] : memref<8x8xf32, #tpu.memory_space<vmem>>, vector<8x8xf32>
    %cst_11 = arith.constant dense<0.000000e+00> : vector<8x256xf32>
    %13 = tpu.matmul %12, %11, %cst_11 {dimension_numbers = #tpu.dot_dimension_numbers<[1], [0], [0], [1], [0, 0, 1, 1], [], []>} : vector<8x8xf32>, vector<8x256xf32>, vector<8x256xf32> -> vector<8x256xf32>
    %c0_12 = arith.constant 0 : index
    %c0_13 = arith.constant 0 : index
    %14 = vector.load %arg6[%c0_12, %c0_13] : memref<8x1xf32, #tpu.memory_space<vmem>>, vector<8x1xf32>
    %15 = vector.broadcast %14 : vector<8x1xf32> to vector<8x256xf32>
    %16 = arith.mulf %13, %15 : vector<8x256xf32>
    %c0_14 = arith.constant 0 : index
    %c0_15 = arith.constant 0 : index
    %17 = vector.load %arg7[%c0_14, %c0_15] : memref<8x1xf32, #tpu.memory_space<vmem>>, vector<8x1xf32>
    %18 = vector.broadcast %17 : vector<8x1xf32> to vector<8x256xf32>
    %19 = arith.addf %16, %18 : vector<8x256xf32>
    %20 = arith.addf %19, %3 : vector<8x256xf32>
    %cst_16 = arith.constant 0.000000e+00 : f32
    %21 = vector.broadcast %cst_16 : f32 to vector<8x256xf32>
    %22 = arith.maximumf %20, %21 : vector<8x256xf32>
    %c0_17 = arith.constant 0 : index
    %c0_18 = arith.constant 0 : index
    %c0_19 = arith.constant 0 : index
    %23 = vector.load %arg8[%c0_17, %c0_18, %c0_19] : memref<1x8x256xf32, #tpu.memory_space<vmem>>, vector<1x8x256xf32>
    %24 = vector.shape_cast %23 : vector<1x8x256xf32> to vector<8x256xf32>
    %25 = vector.shape_cast %22 : vector<8x256xf32> to vector<1x8x256xf32>
    tpu.vector_store %arg8[%c0_17, %c0_18, %c0_19], %25 {strides = array<i32>} : memref<1x8x256xf32, #tpu.memory_space<vmem>>, vector<1x8x256xf32>,
    return
  }
  func.func @transform_0(%arg0: i32) -> (i32, i32, i32) {
    %c0_i32 = arith.constant 0 : i32
    %c0_i32_0 = arith.constant 0 : i32
    %c0_i32_1 = arith.constant 0 : i32
    return %arg0, %c0_i32, %c0_i32_0 : i32, i32, i32
  }
  func.func @transform_1(%arg0: i32) -> (i32, i32) {
    %c0_i32 = arith.constant 0 : i32
    %c0_i32_0 = arith.constant 0 : i32
    %c0_i32_1 = arith.constant 0 : i32
    return %c0_i32, %c0_i32_0 : i32, i32
  }
  func.func @transform_2(%arg0: i32) -> (i32, i32) {
    %c0_i32 = arith.constant 0 : i32
    %c0_i32_0 = arith.constant 0 : i32
    %c0_i32_1 = arith.constant 0 : i32
    return %c0_i32, %c0_i32_0 : i32, i32
  }
  func.func @transform_3(%arg0: i32) -> (i32, i32) {
    %c0_i32 = arith.constant 0 : i32
    %c0_i32_0 = arith.constant 0 : i32
    %c0_i32_1 = arith.constant 0 : i32
    return %c0_i32, %c0_i32_0 : i32, i32
  }
  func.func @transform_4(%arg0: i32) -> (i32, i32) {
    %c0_i32 = arith.constant 0 : i32
    %c0_i32_0 = arith.constant 0 : i32
    %c0_i32_1 = arith.constant 0 : i32
    return %c0_i32, %c0_i32_0 : i32, i32
  }
  func.func @transform_5(%arg0: i32) -> (i32, i32) {
    %c0_i32 = arith.constant 0 : i32
    %c0_i32_0 = arith.constant 0 : i32
    %c0_i32_1 = arith.constant 0 : i32
    return %c0_i32, %c0_i32_0 : i32, i32
  }
  func.func @transform_6(%arg0: i32) -> (i32, i32) {
    %c0_i32 = arith.constant 0 : i32
    %c0_i32_0 = arith.constant 0 : i32
    %c0_i32_1 = arith.constant 0 : i32
    return %c0_i32, %c0_i32_0 : i32, i32
  }
  func.func @transform_7(%arg0: i32) -> (i32, i32, i32) {
    %c0_i32 = arith.constant 0 : i32
    %c0_i32_0 = arith.constant 0 : i32
    %c0_i32_1 = arith.constant 0 : i32
    return %arg0, %c0_i32, %c0_i32_0 : i32, i32, i32
  }
}

</mosaic_0001>

<llo_original>
// kernel: tpu_custom_call.1
$region0: #{tpu_custom_call.1}
  #allocation0 [shape = 'u32[]', space=smem, size = 0x4, offset = 0x4, fixed_abs, tag = 'smem constant byte address 0x4 - core index']
  #allocation1 [shape = 'u32[144,128]{1,0:T(1,128)}', space=vmem, size = 0x12000, scoped, tag = 'internal scratch']
  %s0 = inlined_call_operand.vmem [shape: f32[2,36,256], index: 0, kind: input, shape index: {}]
  %s1 = inlined_call_operand.vmem [shape: f32[8,36], index: 1, kind: input, shape index: {}]
  %s2 = inlined_call_operand.vmem [shape: f32[8,1], index: 2, kind: input, shape index: {}]
  %s3 = inlined_call_operand.vmem [shape: f32[8,1], index: 3, kind: input, shape index: {}]
  %s4 = inlined_call_operand.vmem [shape: f32[8,8], index: 4, kind: input, shape index: {}]
  %s5 = inlined_call_operand.vmem [shape: f32[8,1], index: 5, kind: input, shape index: {}]
  %s6 = inlined_call_operand.vmem [shape: f32[8,1], index: 6, kind: input, shape index: {}]
  %s7 = inlined_call_operand.hbm [shape: f32[2,8,256], index: 7, kind: output, shape index: {}]
  %s8 = sld [smem:[#allocation0]]
  $region61: #{tpu_custom_call.1} parent=0
    _
  %s10 = ssub.s32 1, %s8
  %s11 = scalar_select 0, %s10, %s8
  $region1: #{tpu_custom_call.1} parent=0
    #allocation2 [shape = 'u8[16384]{0}', space=vmem, size = 0x4000, scoped, tag = 'output window, operand 0']
    #allocation3 [shape = 's32[2]{0}', space=sflag, size = 0x8, scoped, tag = 'scoped memory for tpu_custom_call.1']
    %12 = vsyncpa [#allocation3], 0
    %s13 = scalar_lea.sflag [#allocation3], 1
    %14 = vsyncpa %s13, 0
    loop: start=0, step=1, limit=4
    $region2: #{tpu_custom_call.1} parent=1 // loop_pre_header
      _
    $region3: #{tpu_custom_call.1} parent=1 // loop_header
      %s16 = sphi 0, %s20
      %p17 = scmp.ge.s32.totalorder %s16, 4
      %s26 = sphi 0, %s28
      %s29 = sphi 0, %s26
      %s30 = sphi 0, %s29
      %s46 = sphi 0, %s30
      %s50 = sphi 0, %s50
      %s52 = sphi 0, %s50
      %s53 = sphi 0, %s52
      %s67 = sphi 0, %s53
      %s71 = sphi 0, %s71
      %s73 = sphi 0, %s71
      %s74 = sphi 0, %s73
      %s88 = sphi 0, %s74
      %s92 = sphi 0, %s92
      %s94 = sphi 0, %s92
      %s95 = sphi 0, %s94
      %s109 = sphi 0, %s95
      %s113 = sphi 0, %s113
      %s115 = sphi 0, %s113
      %s116 = sphi 0, %s115
      %s130 = sphi 0, %s116
      %s134 = sphi 0, %s134
      %s136 = sphi 0, %s134
      %s137 = sphi 0, %s136
      %s151 = sphi 0, %s137
      %s155 = sphi 0, %s155
      %s157 = sphi 0, %s155
      %s158 = sphi 0, %s157
      %s172 = sphi 0, %s158
      %s178 = sphi 0, %s180
      %s181 = sphi 0, %s178
      %s182 = sphi 0, %s181
      %s198 = sphi 0, %s182
    $region4: #{tpu_custom_call.1} parent=1 // loop_header_branch
      %19 = sbr.rel (%p17) target = $region8
    $region5: #{tpu_custom_call.1} parent=1 // loop_body
      %s21 = ssub.s32 %s16, 1
      %s22 = ssub.s32 %s16, 2
      %s23 = sadd.s32 %s16, 1
      %s24 = ssub.s32 %s16, %s23
      %p25 = scmp.eq.s32.totalorder %s24, 0
      %s27 = sadd.s32 %s26, 1
      %s28 = scalar_select %p25, %s26, %s27
      %p31 = pneg %p25
      %p32 = scmp.eq.s32.totalorder %s16, 1
      %p33 = por %p31, %p32
      %p34 = scmp.ne.s32.totalorder %s26, %s29
      %p35 = scmp.eq.s32.totalorder %s16, 0
      %p36 = por %p34, %p35
      %p37 = scmp.ne.s32.totalorder %s26, %s29
      %p38 = scmp.eq.s32.totalorder %s21, 1
      %p39 = por %p37, %p38
      %p40 = scmp.ne.s32.totalorder %s29, %s30
      %p41 = scmp.eq.s32.totalorder %s21, 0
      %p42 = por %p40, %p41
      %p43 = scmp.ne.s32.totalorder %s29, %s30
      %p44 = scmp.eq.s32.totalorder %s22, 1
      %p45 = por %p43, %p44
      %p47 = scmp.ne.s32.totalorder %s30, %s46
      %p48 = scmp.eq.s32.totalorder %s22, 0
      %p49 = por %p47, %p48
      %s51 = sadd.s32 %s50, 1
      %p54 = scmp.eq.s32.totalorder %s16, 1
      %p55 = scmp.ne.s32.totalorder %s50, %s52
      %p56 = scmp.eq.s32.totalorder %s16, 0
      %p57 = por %p55, %p56
      %p58 = scmp.ne.s32.totalorder %s50, %s52
      %p59 = scmp.eq.s32.totalorder %s21, 1
      %p60 = por %p58, %p59
      %p61 = scmp.ne.s32.totalorder %s52, %s53
      %p62 = scmp.eq.s32.totalorder %s21, 0
      %p63 = por %p61, %p62
      %p64 = scmp.ne.s32.totalorder %s52, %s53
      %p65 = scmp.eq.s32.totalorder %s22, 1
      %p66 = por %p64, %p65
      %p68 = scmp.ne.s32.totalorder %s53, %s67
      %p69 = scmp.eq.s32.totalorder %s22, 0
      %p70 = por %p68, %p69
      %s72 = sadd.s32 %s71, 1
      %p75 = scmp.eq.s32.totalorder %s16, 1
      %p76 = scmp.ne.s32.totalorder %s71, %s73
      %p77 = scmp.eq.s32.totalorder %s16, 0
      %p78 = por %p76, %p77
      %p79 = scmp.ne.s32.totalorder %s71, %s73
      %p80 = scmp.eq.s32.totalorder %s21, 1
      %p81 = por %p79, %p80
      %p82 = scmp.ne.s32.totalorder %s73, %s74
      %p83 = scmp.eq.s32.totalorder %s21, 0
      %p84 = por %p82, %p83
      %p85 = scmp.ne.s32.totalorder %s73, %s74
      %p86 = scmp.eq.s32.totalorder %s22, 1
      %p87 = por %p85, %p86
      %p89 = scmp.ne.s32.totalorder %s74, %s88
      %p90 = scmp.eq.s32.totalorder %s22, 0
      %p91 = por %p89, %p90
      %s93 = sadd.s32 %s92, 1
      %p96 = scmp.eq.s32.totalorder %s16, 1
      %p97 = scmp.ne.s32.totalorder %s92, %s94
      %p98 = scmp.eq.s32.totalorder %s16, 0
      %p99 = por %p97, %p98
      %p100 = scmp.ne.s32.totalorder %s92, %s94
      %p101 = scmp.eq.s32.totalorder %s21, 1
      %p102 = por %p100, %p101
      %p103 = scmp.ne.s32.totalorder %s94, %s95
      %p104 = scmp.eq.s32.totalorder %s21, 0
      %p105 = por %p103, %p104
      %p106 = scmp.ne.s32.totalorder %s94, %s95
      %p107 = scmp.eq.s32.totalorder %s22, 1
      %p108 = por %p106, %p107
      %p110 = scmp.ne.s32.totalorder %s95, %s109
      %p111 = scmp.eq.s32.totalorder %s22, 0
      %p112 = por %p110, %p111
      %s114 = sadd.s32 %s113, 1
      %p117 = scmp.eq.s32.totalorder %s16, 1
      %p118 = scmp.ne.s32.totalorder %s113, %s115
      %p119 = scmp.eq.s32.totalorder %s16, 0
      %p120 = por %p118, %p119
      %p121 = scmp.ne.s32.totalorder %s113, %s115
      %p122 = scmp.eq.s32.totalorder %s21, 1
      %p123 = por %p121, %p122
      %p124 = scmp.ne.s32.totalorder %s115, %s116
      %p125 = scmp.eq.s32.totalorder %s21, 0
      %p126 = por %p124, %p125
      %p127 = scmp.ne.s32.totalorder %s115, %s116
      %p128 = scmp.eq.s32.totalorder %s22, 1
      %p129 = por %p127, %p128
      %p131 = scmp.ne.s32.totalorder %s116, %s130
      %p132 = scmp.eq.s32.totalorder %s22, 0
      %p133 = por %p131, %p132
      %s135 = sadd.s32 %s134, 1
      %p138 = scmp.eq.s32.totalorder %s16, 1
      %p139 = scmp.ne.s32.totalorder %s134, %s136
      %p140 = scmp.eq.s32.totalorder %s16, 0
      %p141 = por %p139, %p140
      %p142 = scmp.ne.s32.totalorder %s134, %s136
      %p143 = scmp.eq.s32.totalorder %s21, 1
      %p144 = por %p142, %p143
      %p145 = scmp.ne.s32.totalorder %s136, %s137
      %p146 = scmp.eq.s32.totalorder %s21, 0
      %p147 = por %p145, %p146
      %p148 = scmp.ne.s32.totalorder %s136, %s137
      %p149 = scmp.eq.s32.totalorder %s22, 1
      %p150 = por %p148, %p149
      %p152 = scmp.ne.s32.totalorder %s137, %s151
      %p153 = scmp.eq.s32.totalorder %s22, 0
      %p154 = por %p152, %p153
      %s156 = sadd.s32 %s155, 1
      %p159 = scmp.eq.s32.totalorder %s16, 1
      %p160 = scmp.ne.s32.totalorder %s155, %s157
      %p161 = scmp.eq.s32.totalorder %s16, 0
      %p162 = por %p160, %p161
      %p163 = scmp.ne.s32.totalorder %s155, %s157
      %p164 = scmp.eq.s32.totalorder %s21, 1
      %p165 = por %p163, %p164
      %p166 = scmp.ne.s32.totalorder %s157, %s158
      %p167 = scmp.eq.s32.totalorder %s21, 0
      %p168 = por %p166, %p167
      %p169 = scmp.ne.s32.totalorder %s157, %s158
      %p170 = scmp.eq.s32.totalorder %s22, 1
      %p171 = por %p169, %p170
      %p173 = scmp.ne.s32.totalorder %s158, %s172
      %p174 = scmp.eq.s32.totalorder %s22, 0
      %p175 = por %p173, %p174
      %s176 = ssub.s32 %s16, %s23
      %p177 = scmp.eq.s32.totalorder %s176, 0
      %s179 = sadd.s32 %s178, 1
      %s180 = scalar_select %p177, %s178, %s179
      %p183 = pneg %p177
      %p184 = scmp.eq.s32.totalorder %s16, 1
      %p185 = por %p183, %p184
      %p186 = scmp.ne.s32.totalorder %s178, %s181
      %p187 = scmp.eq.s32.totalorder %s16, 0
      %p188 = por %p186, %p187
      %p189 = scmp.ne.s32.totalorder %s178, %s181
      %p190 = scmp.eq.s32.totalorder %s21, 1
      %p191 = por %p189, %p190
      %p192 = scmp.ne.s32.totalorder %s181, %s182
      %p193 = scmp.eq.s32.totalorder %s21, 0
      %p194 = por %p192, %p193
      %p195 = scmp.ne.s32.totalorder %s181, %s182
      %p196 = scmp.eq.s32.totalorder %s22, 1
      %p197 = por %p195, %p196
      %p199 = scmp.ne.s32.totalorder %s182, %s198
      %p200 = scmp.eq.s32.totalorder %s22, 0
      %p201 = por %p199, %p200
      %p202 = scmp.le.s32.totalorder 1, %s16
      %p203 = scmp.lt.s32.totalorder %s16, 3
      %p204 = pnand %p202, %p203
      %p205 = pneg %p204
      // Predicated region
      $region9: #{tpu_custom_call.1} parent=5 // pred_check
        _
      $region10: #{tpu_custom_call.1} parent=5 // pred_check_branch
        %207 = sbr.rel (%p204) target = $region12
      $region11: #{tpu_custom_call.1} parent=5 // pred_region
        %s208 = ssub.s32 %s16, 1
        // Predicated region
        $region13: #{tpu_custom_call.1} parent=11 // pred_check
          %p209 = pneg %p63
        $region14: #{tpu_custom_call.1} parent=11 // pred_check_branch
          %211 = sbr.rel (%p209) target = $region16
        $region15: #{tpu_custom_call.1} parent=11 // pred_region
          _
        $region16: #{tpu_custom_call.1} parent=11 // pred_fallthru
          _
        // Predicated region
        $region17: #{tpu_custom_call.1} parent=11 // pred_check
          %p212 = pneg %p84
        $region18: #{tpu_custom_call.1} parent=11 // pred_check_branch
          %214 = sbr.rel (%p212) target = $region20
        $region19: #{tpu_custom_call.1} parent=11 // pred_region
          _
        $region20: #{tpu_custom_call.1} parent=11 // pred_fallthru
          _
        // Predicated region
        $region21: #{tpu_custom_call.1} parent=11 // pred_check
          %p215 = pneg %p105
        $region22: #{tpu_custom_call.1} parent=11 // pred_check_branch
          %217 = sbr.rel (%p215) target = $region24
        $region23: #{tpu_custom_call.1} parent=11 // pred_region
          _
        $region24: #{tpu_custom_call.1} parent=11 // pred_fallthru
          _
        // Predicated region
        $region25: #{tpu_custom_call.1} parent=11 // pred_check
          %p218 = pneg %p126
        $region26: #{tpu_custom_call.1} parent=11 // pred_check_branch
          %220 = sbr.rel (%p218) target = $region28
        $region27: #{tpu_custom_call.1} parent=11 // pred_region
          _
        $region28: #{tpu_custom_call.1} parent=11 // pred_fallthru
          _
        // Predicated region
        $region29: #{tpu_custom_call.1} parent=11 // pred_check
          %p221 = pneg %p147
        $region30: #{tpu_custom_call.1} parent=11 // pred_check_branch
          %223 = sbr.rel (%p221) target = $region32
        $region31: #{tpu_custom_call.1} parent=11 // pred_region
          _
        $region32: #{tpu_custom_call.1} parent=11 // pred_fallthru
          _
        // Predicated region
        $region33: #{tpu_custom_call.1} parent=11 // pred_check
          %p224 = pneg %p168
        $region34: #{tpu_custom_call.1} parent=11 // pred_check_branch
          %226 = sbr.rel (%p224) target = $region36
        $region35: #{tpu_custom_call.1} parent=11 // pred_region
          _
        $region36: #{tpu_custom_call.1} parent=11 // pred_fallthru
          _
      $region12: #{tpu_custom_call.1} parent=5 // pred_fallthru
        _
      %p227 = scmp.lt.s32.totalorder %s16, 2
      // Predicated region
      $region37: #{tpu_custom_call.1} parent=5 // pred_check
        %p228 = pneg %p227
      $region38: #{tpu_custom_call.1} parent=5 // pred_check_branch
        %230 = sbr.rel (%p228) target = $region40
      $region39: #{tpu_custom_call.1} parent=5 // pred_region
        // Predicated region
        $region41: #{tpu_custom_call.1} parent=39 // pred_check
          %p231 = pneg %p36
        $region42: #{tpu_custom_call.1} parent=39 // pred_check_branch
          %233 = sbr.rel (%p231) target = $region44
        $region43: #{tpu_custom_call.1} parent=39 // pred_region
          %p234 = scmp.lt.s32.totalorder %s16, 1
          %s235 = scalar_select %p234, %s16, 1
          %s236 = smul.addr %s235, 10
          %s237 = smul.addr %s236, 8
          %s238 = scalar_lea.vmem %s0, %s237
        $region44: #{tpu_custom_call.1} parent=39 // pred_fallthru
          _
      $region40: #{tpu_custom_call.1} parent=5 // pred_fallthru
        _
      %p239 = scmp.le.s32.totalorder 1, %s16
      %p240 = scmp.lt.s32.totalorder %s16, 3
      %p241 = pnand %p239, %p240
      %p242 = pneg %p241
      // Predicated region
      $region45: #{tpu_custom_call.1} parent=5 // pred_check
        _
      $region46: #{tpu_custom_call.1} parent=5 // pred_check_branch
        %244 = sbr.rel (%p241) target = $region48
      $region47: #{tpu_custom_call.1} parent=5 // pred_region
        %s245 = ssub.s32 %s16, 1
        %p246 = scmp.lt.s32.totalorder %s21, 1
        %s247 = scalar_select %p246, %s21, 1
        %s248 = smul.addr %s247, 10
        %s249 = smul.addr %s248, 8
        %s250 = scalar_lea.vmem %s0, %s249
        %p251 = pneg %p42
        %p252 = pneg %p39
        %p253 = pneg %p63
        %p254 = pneg %p60
        %p255 = pneg %p84
        %p256 = pneg %p81
        %p257 = pneg %p105
        %p258 = pneg %p102
        %p259 = pneg %p126
        %p260 = pneg %p123
        %p261 = pneg %p147
        %p262 = pneg %p144
        %p263 = pneg %p168
        %p264 = pneg %p165
        %p265 = pneg %p194
        %p266 = pneg %p191
        %s267 = sand.u32 %s181, 1
        %s268 = scalar_lea.sflag [#allocation3], %s267
        %s269 = sand.u32 %s181, 1
        %s270 = smul.addr %s269, 16
        %s271 = scalar_lea.vmem [#allocation2], %s270
        %p272 = scmp.lt.s32.totalorder %s21, 1
        %s273 = scalar_select %p272, %s21, 1
        %s274 = smul.addr %s273, 10
        %s275 = smul.addr %s274, 8
        %s276 = scalar_lea.vmem %s0, %s275
        %v277 = vld [vmem:[%s276] sm:$0xff]
        %v278 = vld [vmem:[%s276 + $0x8] sm:$0xff]
        %v279 = vld [vmem:[%s276 + $0x10] sm:$0xff]
        %v280 = vld [vmem:[%s276 + $0x18] sm:$0xff]
        %v281 = vld [vmem:[%s276 + $0x20] sm:$0xff]
        %v282 = vld [vmem:[%s276 + $0x28] sm:$0xff]
        %v283 = vld [vmem:[%s276 + $0x30] sm:$0xff]
        %v284 = vld [vmem:[%s276 + $0x38] sm:$0xff]
        %v285 = vld [vmem:[%s276 + $0x40] sm:$0xf]
        %v286 = vld [vmem:[%s276 + $0x48] sm:$0xf]
        %v287 = vld [vmem:[%s1] sm:$0xff]
        %vm288 = vcmask 293888
        %v290 = vsel %vm288, %v287, 0
        %vm292 = vcmask 1043456
        %v294 = vsel %vm292, %v285, 0
        %v297 = vsel %vm292, %v286, 0
        %299 = vmatprep.subr.mxu0 %v278
        %300 = vmatpush1.msra.mxu0 %v277
        %301 = vmatprep.subr.mxu0 %v280
        %302 = vmatpush1.msra.mxu0 %v279
        %303 = vmatprep.subr.mxu0 %v282
        %304 = vmatpush1.msra.mxu0 %v281
        %305 = vmatprep.subr.mxu0 %v284
        %306 = vmatpush1.msra.mxu0 %v283
        %307 = vmatprep.subr.mxu0 %v297
        %308 = vmatpush1.msra.mxu0 %v294
        %309 = vmatprep.subr.mxu0 0.0
        %310 = vmatpush1.msra.mxu0 0.0
        %311 = vmatprep.subr.mxu0 0.0
        %312 = vmatpush1.msra.mxu0 0.0
        %313 = vmatprep.subr.mxu0 0.0
        %314 = vmatpush1.msra.mxu0 0.0
        %315 = vmatprep.subr.mxu0 0.0
        %316 = vmatpush1.msra.mxu0 0.0
        %317 = vmatprep.subr.mxu0 0.0
        %318 = vmatpush1.msra.mxu0 0.0
        %319 = vmatprep.subr.mxu0 0.0
        %320 = vmatpush1.msra.mxu0 0.0
        %321 = vmatprep.subr.mxu0 0.0
        %322 = vmatpush1.msra.mxu0 0.0
        %323 = vmatprep.subr.mxu0 0.0
        %324 = vmatpush1.msra.mxu0 0.0
        %325 = vmatprep.subr.mxu0 0.0
        %326 = vmatpush1.msra.mxu0 0.0
        %327 = vmatprep.subr.mxu0 0.0
        %328 = vmatpush1.msra.mxu0 0.0
        %329 = vmatprep.subr.mxu0 0.0
        %330 = vmatpush1.msra.mxu0 0.0
        %331 = vmatprep.subr.mxu0 0.0
        %332 = vmatpush1.msra.mxu0 0.0
        %333 = vmatprep.subr.mxu0 0.0
        %334 = vmatpush1.msra.mxu0 0.0
        %335 = vmatprep.subr.mxu0 0.0
        %336 = vmatpush1.msra.mxu0 0.0
        %337 = vmatprep.subr.mxu0 0.0
        %338 = vmatpush1.msra.mxu0 0.0
        %339 = vmatprep.subr.mxu0 0.0
        %340 = vmatpush1.msra.mxu0 0.0
        %341 = vmatprep.subr.mxu0 0.0
        %342 = vmatpush1.msra.mxu0 0.0
        %343 = vmatprep.subr.mxu0 0.0
        %344 = vmatpush1.msra.mxu0 0.0
        %345 = vmatprep.subr.mxu0 0.0
        %346 = vmatpush1.msra.mxu0 0.0
        %347 = vmatprep.subr.mxu0 0.0
        %348 = vmatpush1.msra.mxu0 0.0
        %349 = vmatprep.subr.mxu0 0.0
        %350 = vmatpush1.msra.mxu0 0.0
        %351 = vmatprep.subr.mxu0 0.0
        %352 = vmatpush1.msra.mxu0 0.0
        %353 = vmatprep.subr.mxu0 0.0
        %354 = vmatpush1.msra.mxu0 0.0
        %355 = vmatprep.subr.mxu0 0.0
        %356 = vmatpush1.msra.mxu0 0.0
        %357 = vmatprep.subr.mxu0 0.0
        %358 = vmatpush1.msra.mxu0 0.0
        %359 = vmatprep.subr.mxu0 0.0
        %360 = vmatpush1.msra.mxu0 0.0
        %361 = vmatprep.subr.mxu0 0.0
        %362 = vmatpush1.msra.mxu0 0.0
        %363 = vmatprep.mubr.f32.mxu0 0.0
        %364 = vmatmul.mubr.f32.gmra.mrb[0].mxu0 %v290
        %v365 = vpop.f32.mrb[0].mxu0
        %v366 = vadd.f32 0.0, %v365
        %v367 = vpop.f32.mrb[0].mxu0
        %v368 = vadd.f32 0.0, %v367
        %369 = vdwg.mxu0
        %v370 = vld [vmem:[%s2] sm:$0xff]
        %372 = vset.pattern.permute.xlu0 0
        %373 = vperm.xlu0 %372, %v370
        %v374 = vpop.permute.xlu0 %373
        %v376 = vmul.f32 %v366, %v374
        %v377 = vmul.f32 %v368, %v374
        %v378 = vld [vmem:[%s3] sm:$0xff]
        %380 = vset.pattern.permute.xlu0 0
        %381 = vperm.xlu0 %380, %v378
        %v382 = vpop.permute.xlu0 %381
        %v384 = vadd.f32 %v376, %v382
        %v385 = vadd.f32 %v377, %v382
        %v386 = vmax.f32 %v384, 0.0
        %v387 = vmax.f32 %v385, 0.0
        %v388 = vld [vmem:[%s4] sm:$0xff]
        %vm389 = vcmask 64512
        %v391 = vsel %vm389, %v388, 0
        %393 = vmatprep.subr.mxu0 %v387
        %394 = vmatpush1.msra.mxu0 %v386
        %395 = vmatprep.subr.mxu0 0.0
        %396 = vmatpush1.msra.mxu0 0.0
        %397 = vmatprep.subr.mxu0 0.0
        %398 = vmatpush1.msra.mxu0 0.0
        %399 = vmatprep.subr.mxu0 0.0
        %400 = vmatpush1.msra.mxu0 0.0
        %401 = vmatprep.subr.mxu0 0.0
        %402 = vmatpush1.msra.mxu0 0.0
        %403 = vmatprep.subr.mxu0 0.0
        %404 = vmatpush1.msra.mxu0 0.0
        %405 = vmatprep.subr.mxu0 0.0
        %406 = vmatpush1.msra.mxu0 0.0
        %407 = vmatprep.subr.mxu0 0.0
        %408 = vmatpush1.msra.mxu0 0.0
        %409 = vmatprep.subr.mxu0 0.0
        %410 = vmatpush1.msra.mxu0 0.0
        %411 = vmatprep.subr.mxu0 0.0
        %412 = vmatpush1.msra.mxu0 0.0
        %413 = vmatprep.subr.mxu0 0.0
        %414 = vmatpush1.msra.mxu0 0.0
        %415 = vmatprep.subr.mxu0 0.0
        %416 = vmatpush1.msra.mxu0 0.0
        %417 = vmatprep.subr.mxu0 0.0
        %418 = vmatpush1.msra.mxu0 0.0
        %419 = vmatprep.subr.mxu0 0.0
        %420 = vmatpush1.msra.mxu0 0.0
        %421 = vmatprep.subr.mxu0 0.0
        %422 = vmatpush1.msra.mxu0 0.0
        %423 = vmatprep.subr.mxu0 0.0
        %424 = vmatpush1.msra.mxu0 0.0
        %425 = vmatprep.subr.mxu0 0.0
        %426 = vmatpush1.msra.mxu0 0.0
        %427 = vmatprep.subr.mxu0 0.0
        %428 = vmatpush1.msra.mxu0 0.0
        %429 = vmatprep.subr.mxu0 0.0
        %430 = vmatpush1.msra.mxu0 0.0
        %431 = vmatprep.subr.mxu0 0.0
        %432 = vmatpush1.msra.mxu0 0.0
        %433 = vmatprep.subr.mxu0 0.0
        %434 = vmatpush1.msra.mxu0 0.0
        %435 = vmatprep.subr.mxu0 0.0
        %436 = vmatpush1.msra.mxu0 0.0
        %437 = vmatprep.subr.mxu0 0.0
        %438 = vmatpush1.msra.mxu0 0.0
        %439 = vmatprep.subr.mxu0 0.0
        %440 = vmatpush1.msra.mxu0 0.0
        %441 = vmatprep.subr.mxu0 0.0
        %442 = vmatpush1.msra.mxu0 0.0
        %443 = vmatprep.subr.mxu0 0.0
        %444 = vmatpush1.msra.mxu0 0.0
        %445 = vmatprep.subr.mxu0 0.0
        %446 = vmatpush1.msra.mxu0 0.0
        %447 = vmatprep.subr.mxu0 0.0
        %448 = vmatpush1.msra.mxu0 0.0
        %449 = vmatprep.subr.mxu0 0.0
        %450 = vmatpush1.msra.mxu0 0.0
        %451 = vmatprep.subr.mxu0 0.0
        %452 = vmatpush1.msra.mxu0 0.0
        %453 = vmatprep.subr.mxu0 0.0
        %454 = vmatpush1.msra.mxu0 0.0
        %455 = vmatprep.subr.mxu0 0.0
        %456 = vmatpush1.msra.mxu0 0.0
        %457 = vmatprep.mubr.f32.mxu0 0.0
        %458 = vmatmul.mubr.f32.gmra.mrb[0].mxu0 %v391
        %v459 = vpop.f32.mrb[0].mxu0
        %v460 = vadd.f32 0.0, %v459
        %v461 = vpop.f32.mrb[0].mxu0
        %v462 = vadd.f32 0.0, %v461
        %463 = vdwg.mxu0
        %v464 = vld [vmem:[%s5] sm:$0xff]
        %466 = vset.pattern.permute.xlu0 0
        %467 = vperm.xlu0 %466, %v464
        %v468 = vpop.permute.xlu0 %467
        %v470 = vmul.f32 %v460, %v468
        %v471 = vmul.f32 %v462, %v468
        %v472 = vld [vmem:[%s6] sm:$0xff]
        %474 = vset.pattern.permute.xlu0 0
        %475 = vperm.xlu0 %474, %v472
        %v476 = vpop.permute.xlu0 %475
        %v478 = vadd.f32 %v470, %v476
        %v479 = vadd.f32 %v471, %v476
        %v480 = vadd.f32 %v478, %v366
        %v481 = vadd.f32 %v479, %v368
        %v482 = vmax.f32 %v480, 0.0
        %v483 = vmax.f32 %v481, 0.0
        %484 = vst [vmem:[%s271] sm:$0xff] %v482
        %485 = vst [vmem:[%s271 + $0x8] sm:$0xff] %v483
        %s486 = sand.u32 %s181, 1
        %s487 = scalar_lea.sflag [#allocation3], %s486
        %s488 = sand.u32 %s181, 1
        %s489 = smul.addr %s488, 16
        %s490 = scalar_lea.vmem [#allocation2], %s489
        // Predicated region
        $region49: #{tpu_custom_call.1} parent=47 // pred_check
          %p491 = pneg %p191
        $region50: #{tpu_custom_call.1} parent=47 // pred_check_branch
          %493 = sbr.rel (%p491) target = $region52
        $region51: #{tpu_custom_call.1} parent=47 // pred_region
          %s495 = ssub.s32 256, 256
          %496 = vsyncadd %s487, %s495
          %s497 = smul.addr %s21, 2
          %s498 = smul.addr %s497, 128
          %s499 = scalar_lea.hbm %s7, %s498
          %s501 = sshll.u32 %s490, 4
          %s502 = int_to_ptr.vmem [resolvable:$true] %s501
          %504 = dma.vmem_to_hbm [thread:$0]  %s502, 256, %s499, %s487
        $region52: #{tpu_custom_call.1} parent=47 // pred_fallthru
          _
      $region48: #{tpu_custom_call.1} parent=5 // pred_fallthru
        _
      %p505 = scmp.le.s32.totalorder 2, %s16
      // Predicated region
      $region53: #{tpu_custom_call.1} parent=5 // pred_check
        %p506 = pneg %p505
      $region54: #{tpu_custom_call.1} parent=5 // pred_check_branch
        %508 = sbr.rel (%p506) target = $region56
      $region55: #{tpu_custom_call.1} parent=5 // pred_region
        %s509 = ssub.s32 %s16, 2
        // Predicated region
        $region57: #{tpu_custom_call.1} parent=55 // pred_check
          %p510 = pneg %p197
        $region58: #{tpu_custom_call.1} parent=55 // pred_check_branch
          %512 = sbr.rel (%p510) target = $region60
        $region59: #{tpu_custom_call.1} parent=55 // pred_region
          %s513 = sand.u32 %s182, 1
          %s514 = scalar_lea.sflag [#allocation3], %s513
          %s515 = sand.u32 %s182, 1
          %s516 = smul.addr %s515, 16
          %s517 = scalar_lea.vmem [#allocation2], %s516
          %518 = dma.done %s514, 256
        $region60: #{tpu_custom_call.1} parent=55 // pred_fallthru
          _
      $region56: #{tpu_custom_call.1} parent=5 // pred_fallthru
        _
    $region6: #{tpu_custom_call.1} parent=1 // loop_footer
      %s20 = sadd.s32 1, %s16
    $region7: #{tpu_custom_call.1} parent=1 // loop_footer_branch
      %15 = sbr.rel target = $region3
    $region8: #{tpu_custom_call.1} parent=1 // loop_exit
      _
    %519 = vsyncpa [#allocation3], 1
    %s520 = scalar_lea.sflag [#allocation3], 1
    %521 = vsyncpa %s520, 1

</llo_original>
